<compile_context>
chip_gen: v5e
topology: v5e:2x2
jax: 0.10.0
libtpu: 0.0.40
codegen_flags: <defaults>
</compile_context>

<pallas_src>
import numpy as np
import jax
import jax.numpy as jnp
from jax.experimental import pallas as pl
from jax.experimental.pallas import tpu as pltpu

_BN_EPS = 1e-5
_INV_SQRT2 = 0.7071067811865476


def _gc_kernel(x_ref, w1_ref, w2_ref, aff_ref, o_ref):
    # Per grid-step views (one step handles Mt groups: CI = Mt*D input/output
    # channels, CH = Mt*rD hidden channels, over the FULL batch and length):
    #   x_ref  : (N, CI, L)          native NCL slice for this step's groups
    #   w1_ref : (1, CH, CI)         block-diagonal pw_con1 weight (per step)
    #   w2_ref : (1, CI, CH)         block-diagonal pw_con2 weight (per step)
    #   aff_ref: (1, 2*CH + CI, 1)   packed per-channel params [gamma|beta|b2]
    #   o_ref  : (N, CI, L)
    N = x_ref.shape[0]
    CH = w1_ref.shape[1]

    w1 = w1_ref[0]
    w2 = w2_ref[0]
    aff = aff_ref[0]
    gamma = aff[:CH, :]
    beta = aff[CH:2 * CH, :]
    b2 = aff[2 * CH:, :]

    # pw_con1: grouped 1x1 conv == block-diagonal matmul, one clean 2-D MXU
    # matmul per (small, static) sample.  b1 intentionally omitted: BN's mean
    # subtraction cancels it exactly.
    # TODO(synk): for scaled-up shapes, cast matmul inputs to bf16 (keep f32
    # accumulation) for full MXU rate; f32 kept here for tight f32 parity.
    hs = [jnp.dot(w1, x_ref[n], preferred_element_type=jnp.float32)
          for n in range(N)]                                      # each (CH, L)

    # BatchNorm1d training-mode biased stats over (N, L), per hidden channel.
    inv_nl = 1.0 / (N * x_ref.shape[-1])
    s1 = jnp.zeros((CH, 1), jnp.float32)
    s2 = jnp.zeros((CH, 1), jnp.float32)
    for h in hs:
        s1 = s1 + jnp.sum(h, axis=-1, keepdims=True)
        s2 = s2 + jnp.sum(h * h, axis=-1, keepdims=True)
    mean = s1 * inv_nl
    var = jnp.maximum(s2 * inv_nl - mean * mean, 0.0)  # clamp: f32 cancellation
    scale = gamma * jax.lax.rsqrt(var + _BN_EPS)
    shift = beta - mean * scale

    for n in range(N):
        h = hs[n] * scale + shift
        # Exact (erf-based) GELU, matching F.gelu(approximate='none').
        # TODO(synk): if the parity budget ever allows, tanh-approx GELU moves
        # this off the VALU erf polynomial onto the otherwise-idle EUP slot.
        h = 0.5 * h * (1.0 + jax.lax.erf(h * _INV_SQRT2))
        # pw_con2 back to CI channels (+ bias); lane-dense unmasked store.
        y = jnp.dot(w2, h, preferred_element_type=jnp.float32) + b2
        o_ref[n] = y.astype(o_ref.dtype)


def _block_diag_per_step(w, steps, mt, ro, co):
    """(steps*mt, ro, co) per-group weights -> (steps, mt*ro, mt*co) block-diag."""
    w = w.reshape(steps, mt, ro, co)
    bd = jnp.zeros((steps, mt * ro, mt * co), w.dtype)
    for i in range(mt):
        bd = bd.at[:, i * ro:(i + 1) * ro, i * co:(i + 1) * co].set(w[:, i])
    return bd


def gc_module_forward(x, params, M, D, r, group_steps=1):
    """x: (N, M*D, L) float32, native PyTorch NCL layout.  Returns (N, M*D, L).

    group_steps: how many grid steps the M groups are split into.  1 (default)
    is best on v5e/v6e (single TensorCore: the grid is a serial loop).
    # TODO(synk): on v7x use group_steps=2 with
    # dimension_semantics=(pltpu.CORE_PARALLEL,) so both TensorCores get work,
    # and add an L-tiling grid axis (two-pass BN) once N*L blocks approach the
    # 64 MiB VMEM budget; not needed at these sizes.
    """
    w1, b1, gamma, beta, w2, b2 = params
    del b1  # cancels exactly against BN's per-channel mean subtraction
    N, C, L = x.shape
    rD = r * D
    assert C == M * D and M % group_steps == 0
    Mt = M // group_steps
    CH, CI = Mt * rD, Mt * D

    # One-time tiny weight prep (group-major channel order matches PyTorch
    # grouped Conv1d channel slicing).  x itself is passed through untouched —
    # no HBM round-trip transposes.
    w1_bd = _block_diag_per_step(w1, group_steps, Mt, rD, D)    # (steps, CH, CI)
    w2_bd = _block_diag_per_step(w2, group_steps, Mt, D, rD)    # (steps, CI, CH)
    aff = jnp.concatenate(
        [gamma.reshape(group_steps, CH),
         beta.reshape(group_steps, CH),
         b2.reshape(group_steps, CI)], axis=1)[..., None]       # (steps, 2CH+CI, 1)

    return pl.pallas_call(
        _gc_kernel,
        out_shape=jax.ShapeDtypeStruct((N, C, L), x.dtype),
        grid=(group_steps,),
        in_specs=[
            pl.BlockSpec((N, CI, L), lambda g: (0, g, 0)),           # x (native)
            pl.BlockSpec((1, CH, CI), lambda g: (g, 0, 0)),          # w1 block-diag
            pl.BlockSpec((1, CI, CH), lambda g: (g, 0, 0)),          # w2 block-diag
            pl.BlockSpec((1, 2 * CH + CI, 1), lambda g: (g, 0, 0)),  # gamma|beta|b2
        ],
        out_specs=pl.BlockSpec((N, CI, L), lambda g: (0, g, 0)),
        compiler_params=pltpu.CompilerParams(
            dimension_semantics=("parallel",)),
    )(x, w1_bd, w2_bd, aff)


def init_params(key, M, D, r):
    """Deterministic init mirroring PyTorch Conv1d/BatchNorm1d default shapes."""
    rD = r * D
    k1, k2, k3, k4 = jax.random.split(key, 4)
    bound1 = 1.0 / np.sqrt(D)        # conv1 per-group fan_in = D * kernel(1)
    bound2 = 1.0 / np.sqrt(rD)       # conv2 per-group fan_in = rD * kernel(1)
    # pw_con1.weight (r*M*D, D, 1)  -> (M, rD, D);  bias (r*M*D,) -> (M, rD, 1)
    w1 = jax.random.uniform(k1, (M, rD, D), jnp.float32, -bound1, bound1)
    b1 = jax.random.uniform(k2, (M, rD, 1), jnp.float32, -bound1, bound1)
    # pw_con2.weight (M*D, r*D, 1)  -> (M, D, rD);  bias (M*D,) -> (M, D, 1)
    w2 = jax.random.uniform(k3, (M, D, rD), jnp.float32, -bound2, bound2)
    b2 = jax.random.uniform(k4, (M, D, 1), jnp.float32, -bound2, bound2)
    # BatchNorm affine params (gamma=1, beta=0), one per hidden channel.
    gamma = jnp.ones((M, rD, 1), jnp.float32)
    beta = jnp.zeros((M, rD, 1), jnp.float32)
    return (w1, b1, gamma, beta, w2, b2)


def reference_forward(x, params, M, D, r):
    """Pure-JAX reference of the PyTorch forward (training-mode BN, exact GELU,
    includes b1 — verifies the kernel's b1 cancellation)."""
    w1, b1, gamma, beta, w2, b2 = params
    N, C, L = x.shape
    x4 = x.reshape(N, M, D, L)
    h = jnp.einsum('mcd,nmdl->nmcl', w1, x4) + b1[None]
    mean = jnp.mean(h, axis=(0, 3), keepdims=True)
    var = jnp.mean(jnp.square(h - mean), axis=(0, 3), keepdims=True)
    h = (h - mean) / jnp.sqrt(var + _BN_EPS) * gamma[None] + beta[None]
    h = jax.nn.gelu(h, approximate=False)
    y = jnp.einsum('mdc,nmcl->nmdl', w2, h) + b2[None]
    return y.reshape(N, C, L)


if __name__ == "__main__":
    # TODO(synk): the original module declares bn=BatchNorm1d(M*D) but applies it
    # to the r*M*D-channel output of pw_con1, so it is only self-consistent for
    # r == 1; we use r = 1 (the kernel itself handles general r with
    # per-hidden-channel BN).  BN running_mean/running_var training-time
    # side-effect updates are not emitted.
    M, D, r = 4, 8, 1
    N, L = 2, 128

    key = jax.random.PRNGKey(0)
    kx, kp = jax.random.split(key)
    x = jax.random.normal(kx, (N, M * D, L), jnp.float32)
    params = init_params(kp, M, D, r)

    y = gc_module_forward(x, params, M, D, r)
    jax.block_until_ready(y)

    y_ref = reference_forward(x, params, M, D, r)
    np.testing.assert_allclose(np.asarray(y), np.asarray(y_ref),
                               atol=1e-4, rtol=1e-4)
    print("KERNEL_OK")
</pallas_src>

<mosaic_0001>
module attributes {stable_mosaic.version = 11 : i64} {
  func.func @_gc_kernel(%arg0: i32, %arg1: memref<2x32x128xf32, #tpu.memory_space<vmem>>, %arg2: memref<1x32x32xf32, #tpu.memory_space<vmem>>, %arg3: memref<1x32x32xf32, #tpu.memory_space<vmem>>, %arg4: memref<1x96x1xf32, #tpu.memory_space<vmem>>, %arg5: memref<2x32x128xf32, #tpu.memory_space<vmem>>) attributes {dimension_semantics = [#tpu.dimension_semantics<parallel>], iteration_bounds = array<i64: 1>, scalar_prefetch = 0 : i64, scratch_operands = 0 : i64, tpu.core_type = #tpu.core_type<tc>, window_params = [{transform_indices = @transform_0, window_bounds = array<i64: 2, 32, 128>}, {transform_indices = @transform_1, window_bounds = array<i64: 1, 32, 32>}, {transform_indices = @transform_2, window_bounds = array<i64: 1, 32, 32>}, {transform_indices = @transform_3, window_bounds = array<i64: 1, 96, 1>}, {transform_indices = @transform_4, window_bounds = array<i64: 2, 32, 128>}]} {
    %c0 = arith.constant 0 : index
    %c0_0 = arith.constant 0 : index
    %c0_1 = arith.constant 0 : index
    %0 = vector.load %arg2[%c0, %c0_0, %c0_1] : memref<1x32x32xf32, #tpu.memory_space<vmem>>, vector<1x32x32xf32>
    %1 = vector.shape_cast %0 : vector<1x32x32xf32> to vector<32x32xf32>
    %c0_2 = arith.constant 0 : index
    %c0_3 = arith.constant 0 : index
    %c0_4 = arith.constant 0 : index
    %2 = vector.load %arg3[%c0_2, %c0_3, %c0_4] : memref<1x32x32xf32, #tpu.memory_space<vmem>>, vector<1x32x32xf32>
    %3 = vector.shape_cast %2 : vector<1x32x32xf32> to vector<32x32xf32>
    %c0_5 = arith.constant 0 : index
    %c0_6 = arith.constant 0 : index
    %c0_7 = arith.constant 0 : index
    %4 = vector.load %arg4[%c0_5, %c0_6, %c0_7] : memref<1x96x1xf32, #tpu.memory_space<vmem>>, vector<1x96x1xf32>
    %5 = vector.shape_cast %4 : vector<1x96x1xf32> to vector<96x1xf32>
    %6 = vector.extract_strided_slice %5 {offsets = [0, 0], sizes = [32, 1], strides = [1, 1]} : vector<96x1xf32> to vector<32x1xf32>
    %7 = vector.extract_strided_slice %5 {offsets = [32, 0], sizes = [32, 1], strides = [1, 1]} : vector<96x1xf32> to vector<32x1xf32>
    %8 = vector.extract_strided_slice %5 {offsets = [64, 0], sizes = [32, 1], strides = [1, 1]} : vector<96x1xf32> to vector<32x1xf32>
    %c0_8 = arith.constant 0 : index
    %c0_9 = arith.constant 0 : index
    %c0_10 = arith.constant 0 : index
    %9 = vector.load %arg1[%c0_8, %c0_9, %c0_10] : memref<2x32x128xf32, #tpu.memory_space<vmem>>, vector<1x32x128xf32>
    %10 = vector.shape_cast %9 : vector<1x32x128xf32> to vector<32x128xf32>
    %cst = arith.constant dense<0.000000e+00> : vector<32x128xf32>
    %11 = tpu.matmul %1, %10, %cst {dimension_numbers = #tpu.dot_dimension_numbers<[1], [0], [0], [1], [0, 0, 1, 1], [], []>} : vector<32x32xf32>, vector<32x128xf32>, vector<32x128xf32> -> vector<32x128xf32>
    %c1 = arith.constant 1 : index
    %c0_11 = arith.constant 0 : index
    %c0_12 = arith.constant 0 : index
    %12 = vector.load %arg1[%c1, %c0_11, %c0_12] : memref<2x32x128xf32, #tpu.memory_space<vmem>>, vector<1x32x128xf32>
    %13 = vector.shape_cast %12 : vector<1x32x128xf32> to vector<32x128xf32>
    %cst_13 = arith.constant dense<0.000000e+00> : vector<32x128xf32>
    %14 = tpu.matmul %1, %13, %cst_13 {dimension_numbers = #tpu.dot_dimension_numbers<[1], [0], [0], [1], [0, 0, 1, 1], [], []>} : vector<32x32xf32>, vector<32x128xf32>, vector<32x128xf32> -> vector<32x128xf32>
    %cst_14 = arith.constant 0.000000e+00 : f32
    %15 = vector.broadcast %cst_14 : f32 to vector<32x1xf32>
    %cst_15 = arith.constant 0.000000e+00 : f32
    %16 = vector.broadcast %cst_15 : f32 to vector<32x1xf32>
    %cst_16 = arith.constant dense<0.000000e+00> : vector<32xf32>
    %17 = vector.multi_reduction <add>, %11, %cst_16 [1] : vector<32x128xf32> to vector<32xf32>
    %18 = vector.shape_cast %17 : vector<32xf32> to vector<32x1xf32>
    %19 = arith.addf %15, %18 : vector<32x1xf32>
    %20 = arith.mulf %11, %11 : vector<32x128xf32>
    %cst_17 = arith.constant dense<0.000000e+00> : vector<32xf32>
    %21 = vector.multi_reduction <add>, %20, %cst_17 [1] : vector<32x128xf32> to vector<32xf32>
    %22 = vector.shape_cast %21 : vector<32xf32> to vector<32x1xf32>
    %23 = arith.addf %16, %22 : vector<32x1xf32>
    %cst_18 = arith.constant dense<0.000000e+00> : vector<32xf32>
    %24 = vector.multi_reduction <add>, %14, %cst_18 [1] : vector<32x128xf32> to vector<32xf32>
    %25 = vector.shape_cast %24 : vector<32xf32> to vector<32x1xf32>
    %26 = arith.addf %19, %25 : vector<32x1xf32>
    %27 = arith.mulf %14, %14 : vector<32x128xf32>
    %cst_19 = arith.constant dense<0.000000e+00> : vector<32xf32>
    %28 = vector.multi_reduction <add>, %27, %cst_19 [1] : vector<32x128xf32> to vector<32xf32>
    %29 = vector.shape_cast %28 : vector<32xf32> to vector<32x1xf32>
    %30 = arith.addf %23, %29 : vector<32x1xf32>
    %cst_20 = arith.constant 3.906250e-03 : f32
    %31 = vector.broadcast %cst_20 : f32 to vector<32x1xf32>
    %32 = arith.mulf %26, %31 : vector<32x1xf32>
    %cst_21 = arith.constant 3.906250e-03 : f32
    %33 = vector.broadcast %cst_21 : f32 to vector<32x1xf32>
    %34 = arith.mulf %30, %33 : vector<32x1xf32>
    %35 = arith.mulf %32, %32 : vector<32x1xf32>
    %36 = arith.subf %34, %35 : vector<32x1xf32>
    %cst_22 = arith.constant 0.000000e+00 : f32
    %37 = vector.broadcast %cst_22 : f32 to vector<32x1xf32>
    %38 = arith.maximumf %36, %37 : vector<32x1xf32>
    %cst_23 = arith.constant 9.99999974E-6 : f32
    %39 = vector.broadcast %cst_23 : f32 to vector<32x1xf32>
    %40 = arith.addf %38, %39 : vector<32x1xf32>
    %41 = math.rsqrt %40 : vector<32x1xf32>
    %42 = arith.mulf %6, %41 : vector<32x1xf32>
    %43 = arith.mulf %32, %42 : vector<32x1xf32>
    %44 = arith.subf %7, %43 : vector<32x1xf32>
    %45 = vector.broadcast %42 : vector<32x1xf32> to vector<32x128xf32>
    %46 = arith.mulf %11, %45 : vector<32x128xf32>
    %47 = vector.broadcast %44 : vector<32x1xf32> to vector<32x128xf32>
    %48 = arith.addf %46, %47 : vector<32x128xf32>
    %cst_24 = arith.constant 5.000000e-01 : f32
    %49 = vector.broadcast %cst_24 : f32 to vector<32x128xf32>
    %50 = arith.mulf %49, %48 : vector<32x128xf32>
    %cst_25 = arith.constant 0.707106769 : f32
    %51 = vector.broadcast %cst_25 : f32 to vector<32x128xf32>
    %52 = arith.mulf %48, %51 : vector<32x128xf32>
    %53 = math.erf %52 : vector<32x128xf32>
    %cst_26 = arith.constant 1.000000e+00 : f32
    %54 = vector.broadcast %cst_26 : f32 to vector<32x128xf32>
    %55 = arith.addf %54, %53 : vector<32x128xf32>
    %56 = arith.mulf %50, %55 : vector<32x128xf32>
    %cst_27 = arith.constant dense<0.000000e+00> : vector<32x128xf32>
    %57 = tpu.matmul %3, %56, %cst_27 {dimension_numbers = #tpu.dot_dimension_numbers<[1], [0], [0], [1], [0, 0, 1, 1], [], []>} : vector<32x32xf32>, vector<32x128xf32>, vector<32x128xf32> -> vector<32x128xf32>
    %58 = vector.broadcast %8 : vector<32x1xf32> to vector<32x128xf32>
    %59 = arith.addf %57, %58 : vector<32x128xf32>
    %c0_28 = arith.constant 0 : index
    %c0_29 = arith.constant 0 : index
    %c0_30 = arith.constant 0 : index
    %60 = vector.load %arg5[%c0_28, %c0_29, %c0_30] : memref<2x32x128xf32, #tpu.memory_space<vmem>>, vector<1x32x128xf32>
    %61 = vector.shape_cast %60 : vector<1x32x128xf32> to vector<32x128xf32>
    %62 = vector.shape_cast %59 : vector<32x128xf32> to vector<1x32x128xf32>
    tpu.vector_store %arg5[%c0_28, %c0_29, %c0_30], %62 {strides = array<i32>} : memref<2x32x128xf32, #tpu.memory_space<vmem>>, vector<1x32x128xf32>,
    %63 = vector.broadcast %42 : vector<32x1xf32> to vector<32x128xf32>
    %64 = arith.mulf %14, %63 : vector<32x128xf32>
    %65 = vector.broadcast %44 : vector<32x1xf32> to vector<32x128xf32>
    %66 = arith.addf %64, %65 : vector<32x128xf32>
    %cst_31 = arith.constant 5.000000e-01 : f32
    %67 = vector.broadcast %cst_31 : f32 to vector<32x128xf32>
    %68 = arith.mulf %67, %66 : vector<32x128xf32>
    %cst_32 = arith.constant 0.707106769 : f32
    %69 = vector.broadcast %cst_32 : f32 to vector<32x128xf32>
    %70 = arith.mulf %66, %69 : vector<32x128xf32>
    %71 = math.erf %70 : vector<32x128xf32>
    %cst_33 = arith.constant 1.000000e+00 : f32
    %72 = vector.broadcast %cst_33 : f32 to vector<32x128xf32>
    %73 = arith.addf %72, %71 : vector<32x128xf32>
    %74 = arith.mulf %68, %73 : vector<32x128xf32>
    %cst_34 = arith.constant dense<0.000000e+00> : vector<32x128xf32>
    %75 = tpu.matmul %3, %74, %cst_34 {dimension_numbers = #tpu.dot_dimension_numbers<[1], [0], [0], [1], [0, 0, 1, 1], [], []>} : vector<32x32xf32>, vector<32x128xf32>, vector<32x128xf32> -> vector<32x128xf32>
    %76 = vector.broadcast %8 : vector<32x1xf32> to vector<32x128xf32>
    %77 = arith.addf %75, %76 : vector<32x128xf32>
    %c1_35 = arith.constant 1 : index
    %c0_36 = arith.constant 0 : index
    %c0_37 = arith.constant 0 : index
    %78 = vector.load %arg5[%c1_35, %c0_36, %c0_37] : memref<2x32x128xf32, #tpu.memory_space<vmem>>, vector<1x32x128xf32>
    %79 = vector.shape_cast %78 : vector<1x32x128xf32> to vector<32x128xf32>
    %80 = vector.shape_cast %77 : vector<32x128xf32> to vector<1x32x128xf32>
    tpu.vector_store %arg5[%c1_35, %c0_36, %c0_37], %80 {strides = array<i32>} : memref<2x32x128xf32, #tpu.memory_space<vmem>>, vector<1x32x128xf32>,
    return
  }
  func.func @transform_0(%arg0: i32) -> (i32, i32, i32) {
    %c0_i32 = arith.constant 0 : i32
    %c0_i32_0 = arith.constant 0 : i32
    %c0_i32_1 = arith.constant 0 : i32
    return %c0_i32, %arg0, %c0_i32_0 : i32, i32, i32
  }
  func.func @transform_1(%arg0: i32) -> (i32, i32, i32) {
    %c0_i32 = arith.constant 0 : i32
    %c0_i32_0 = arith.constant 0 : i32
    %c0_i32_1 = arith.constant 0 : i32
    return %arg0, %c0_i32, %c0_i32_0 : i32, i32, i32
  }
  func.func @transform_2(%arg0: i32) -> (i32, i32, i32) {
    %c0_i32 = arith.constant 0 : i32
    %c0_i32_0 = arith.constant 0 : i32
    %c0_i32_1 = arith.constant 0 : i32
    return %arg0, %c0_i32, %c0_i32_0 : i32, i32, i32
  }
  func.func @transform_3(%arg0: i32) -> (i32, i32, i32) {
    %c0_i32 = arith.constant 0 : i32
    %c0_i32_0 = arith.constant 0 : i32
    %c0_i32_1 = arith.constant 0 : i32
    return %arg0, %c0_i32, %c0_i32_0 : i32, i32, i32
  }
  func.func @transform_4(%arg0: i32) -> (i32, i32, i32) {
    %c0_i32 = arith.constant 0 : i32
    %c0_i32_0 = arith.constant 0 : i32
    %c0_i32_1 = arith.constant 0 : i32
    return %c0_i32, %arg0, %c0_i32_0 : i32, i32, i32
  }
}

</mosaic_0001>

<llo_original>
// kernel: tpu_custom_call.1
$region0: #{tpu_custom_call.1}
  #allocation0 [shape = 'u32[]', space=smem, size = 0x4, offset = 0x4, fixed_abs, tag = 'smem constant byte address 0x4 - core index']
  #allocation1 [shape = 'u32[72,128]{1,0:T(1,128)}', space=vmem, size = 0x9000, scoped, tag = 'internal scratch']
  %s0 = inlined_call_operand.vmem [shape: f32[2,32,128], index: 0, kind: input, shape index: {}]
  %s1 = inlined_call_operand.vmem [shape: f32[1,32,32], index: 1, kind: input, shape index: {}]
  %s2 = inlined_call_operand.hbm [shape: f32[1,32,32], index: 2, kind: input, shape index: {}]
  %s3 = inlined_call_operand.vmem [shape: f32[1,96,1], index: 3, kind: input, shape index: {}]
  %s4 = inlined_call_operand.hbm [shape: f32[2,32,128], index: 4, kind: output, shape index: {}]
  %s5 = sld [smem:[#allocation0]]
  $region30: #{tpu_custom_call.1} parent=0
    _
  %s7 = ssub.s32 1, %s5
  %s8 = scalar_select 0, %s7, %s5
  $region1: #{tpu_custom_call.1} parent=0
    #allocation2 [shape = 'u8[16384]{0}', space=vmem, size = 0x4000, scoped, tag = 'input window, operand 2, single buffered']
    #allocation3 [shape = 's32[1]{0}', space=sflag, size = 0x4, scoped, tag = 'scoped memory for tpu_custom_call.1']
    #allocation4 [shape = 's32[1]{0}', space=sflag, size = 0x4, scoped, tag = 'scoped memory for tpu_custom_call.1']
    #allocation5 [shape = 'u8[32768]{0}', space=vmem, size = 0x8000, scoped, tag = 'output window, operand 0, single buffered']
    %9 = vsyncpa [#allocation3], 0
    %10 = vsyncpa [#allocation4], 0
    // Predicated region
    $region2: #{tpu_custom_call.1} parent=1 // pred_check
      _
    $region3: #{tpu_custom_call.1} parent=1 // pred_check_branch
      %12 = sbr.rel (0) target = $region5
    $region4: #{tpu_custom_call.1} parent=1 // pred_region
      _
    $region5: #{tpu_custom_call.1} parent=1 // pred_fallthru
      _
    // Predicated region
    $region6: #{tpu_custom_call.1} parent=1 // pred_check
      _
    $region7: #{tpu_custom_call.1} parent=1 // pred_check_branch
      %14 = sbr.rel (0) target = $region9
    $region8: #{tpu_custom_call.1} parent=1 // pred_region
      _
    $region9: #{tpu_custom_call.1} parent=1 // pred_fallthru
      _
    // Predicated region
    $region10: #{tpu_custom_call.1} parent=1 // pred_check
      _
    $region11: #{tpu_custom_call.1} parent=1 // pred_check_branch
      %16 = sbr.rel (0) target = $region13
    $region12: #{tpu_custom_call.1} parent=1 // pred_region
      %18 = vsyncadd [#allocation3], 0
      %s19 = sshll.u32 %s2, 4
      %s20 = int_to_ptr.hbm [resolvable:$true] %s19
      %s21 = sshll.u32 [#allocation2], 4
      %s22 = int_to_ptr.vmem [resolvable:$true] %s21
      %27 = dma.hbm_to_vmem [thread:$0]  %s20, 512, %s22, [#allocation3], 128, 128, 8
    $region13: #{tpu_custom_call.1} parent=1 // pred_fallthru
      _
    // Predicated region
    $region14: #{tpu_custom_call.1} parent=1 // pred_check
      _
    $region15: #{tpu_custom_call.1} parent=1 // pred_check_branch
      %29 = sbr.rel (0) target = $region17
    $region16: #{tpu_custom_call.1} parent=1 // pred_region
      _
    $region17: #{tpu_custom_call.1} parent=1 // pred_fallthru
      _
    // Predicated region
    $region18: #{tpu_custom_call.1} parent=1 // pred_check
      _
    $region19: #{tpu_custom_call.1} parent=1 // pred_check_branch
      %31 = sbr.rel (0) target = $region21
    $region20: #{tpu_custom_call.1} parent=1 // pred_region
      %33 = dma.done [#allocation3], 512
    $region21: #{tpu_custom_call.1} parent=1 // pred_fallthru
      _
    %v34 = vld [vmem:[%s1] sm:$0xff]
    %v35 = vld [vmem:[%s1 + $0x8] sm:$0xff]
    %v36 = vld [vmem:[%s1 + $0x10] sm:$0xff]
    %v37 = vld [vmem:[%s1 + $0x18] sm:$0xff]
    %v38 = vld [vmem:[#allocation2] sm:$0xff]
    %v39 = vld [vmem:[#allocation2 + $0x8] sm:$0xff]
    %v40 = vld [vmem:[#allocation2 + $0x10] sm:$0xff]
    %v41 = vld [vmem:[#allocation2 + $0x18] sm:$0xff]
    %v42 = vld [vmem:[%s3] sm:$0xff]
    %v43 = vld [vmem:[%s3 + $0x8] sm:$0xff]
    %v44 = vld [vmem:[%s3 + $0x10] sm:$0xff]
    %v45 = vld [vmem:[%s3 + $0x18] sm:$0xff]
    %v46 = vld [vmem:[%s3 + $0x20] sm:$0xff]
    %v47 = vld [vmem:[%s3 + $0x28] sm:$0xff]
    %v48 = vld [vmem:[%s3 + $0x30] sm:$0xff]
    %v49 = vld [vmem:[%s3 + $0x38] sm:$0xff]
    %v50 = vld [vmem:[%s3 + $0x40] sm:$0xff]
    %v51 = vld [vmem:[%s3 + $0x48] sm:$0xff]
    %v52 = vld [vmem:[%s3 + $0x50] sm:$0xff]
    %v53 = vld [vmem:[%s3 + $0x58] sm:$0xff]
    %v54 = vld [vmem:[%s0] sm:$0xff]
    %v55 = vld [vmem:[%s0 + $0x8] sm:$0xff]
    %v56 = vld [vmem:[%s0 + $0x10] sm:$0xff]
    %v57 = vld [vmem:[%s0 + $0x18] sm:$0xff]
    %vm58 = vcmask 261120
    %v60 = vsel %vm58, %v34, 0
    %v63 = vsel %vm58, %v35, 0
    %v66 = vsel %vm58, %v36, 0
    %v69 = vsel %vm58, %v37, 0
    %71 = vmatpush.msra.mxu0 0.0
    %72 = vmatpush.msra.mxu0 0.0
    %73 = vmatpush.msra.mxu0 0.0
    %74 = vmatpush.msra.mxu0 0.0
    %75 = vmatpush.msra.mxu0 0.0
    %76 = vmatpush.msra.mxu0 0.0
    %77 = vmatpush.msra.mxu0 0.0
    %78 = vmatpush.msra.mxu0 0.0
    %79 = vmatpush.msra.mxu0 0.0
    %80 = vmatpush.msra.mxu0 0.0
    %81 = vmatpush.msra.mxu0 0.0
    %82 = vmatpush.msra.mxu0 0.0
    %83 = vmatpush.msra.mxu0 %v57
    %84 = vmatpush.msra.mxu0 %v56
    %85 = vmatpush.msra.mxu0 %v55
    %86 = vmatpush.msra.mxu0 %v54
    %87 = vmatmul.f32.gmra.mxu0 %v60
    %v88 = vpop.f32.mrf.mxu0
    %v89 = vadd.f32 0.0, %v88
    %90 = vmatmul.f32.gmra.mxu0 %v63
    %v91 = vpop.f32.mrf.mxu0
    %v92 = vadd.f32 0.0, %v91
    %93 = vmatmul.f32.gmra.mxu0 %v66
    %v94 = vpop.f32.mrf.mxu0
    %v95 = vadd.f32 0.0, %v94
    %96 = vmatmul.f32.gmra.mxu0 %v69
    %v97 = vpop.f32.mrf.mxu0
    %v98 = vadd.f32 0.0, %v97
    %99 = vdwg.mxu0
    %s100 = scalar_lea.vmem %s0, 32
    %v101 = vld [vmem:[%s100] sm:$0xff]
    %v102 = vld [vmem:[%s100 + $0x8] sm:$0xff]
    %v103 = vld [vmem:[%s100 + $0x10] sm:$0xff]
    %v104 = vld [vmem:[%s100 + $0x18] sm:$0xff]
    %105 = vmatpush.msra.mxu0 0.0
    %106 = vmatpush.msra.mxu0 0.0
    %107 = vmatpush.msra.mxu0 0.0
    %108 = vmatpush.msra.mxu0 0.0
    %109 = vmatpush.msra.mxu0 0.0
    %110 = vmatpush.msra.mxu0 0.0
    %111 = vmatpush.msra.mxu0 0.0
    %112 = vmatpush.msra.mxu0 0.0
    %113 = vmatpush.msra.mxu0 0.0
    %114 = vmatpush.msra.mxu0 0.0
    %115 = vmatpush.msra.mxu0 0.0
    %116 = vmatpush.msra.mxu0 0.0
    %117 = vmatpush.msra.mxu0 %v104
    %118 = vmatpush.msra.mxu0 %v103
    %119 = vmatpush.msra.mxu0 %v102
    %120 = vmatpush.msra.mxu0 %v101
    %121 = vmatmul.f32.gmra.mxu0 %v60
    %v122 = vpop.f32.mrf.mxu0
    %v123 = vadd.f32 0.0, %v122
    %124 = vmatmul.f32.gmra.mxu0 %v63
    %v125 = vpop.f32.mrf.mxu0
    %v126 = vadd.f32 0.0, %v125
    %127 = vmatmul.f32.gmra.mxu0 %v66
    %v128 = vpop.f32.mrf.mxu0
    %v129 = vadd.f32 0.0, %v128
    %130 = vmatmul.f32.gmra.mxu0 %v69
    %v131 = vpop.f32.mrf.mxu0
    %v132 = vadd.f32 0.0, %v131
    %133 = vdwg.mxu0
    %134 = vadd.xlane.f32.xlu0 %v89
    %v135 = vpop.xlane.xlu0 %134
    %136 = vadd.xlane.f32.xlu0 %v92
    %v137 = vpop.xlane.xlu0 %136
    %138 = vadd.xlane.f32.xlu0 %v95
    %v139 = vpop.xlane.xlu0 %138
    %140 = vadd.xlane.f32.xlu0 %v98
    %v141 = vpop.xlane.xlu0 %140
    %v142 = vadd.f32 %v135, 0.0
    %v143 = vadd.f32 %v137, 0.0
    %v144 = vadd.f32 %v139, 0.0
    %v145 = vadd.f32 %v141, 0.0
    %v146 = vmul.f32 %v89, %v89
    %v147 = vmul.f32 %v92, %v92
    %v148 = vmul.f32 %v95, %v95
    %v149 = vmul.f32 %v98, %v98
    %150 = vadd.xlane.f32.xlu0 %v146
    %v151 = vpop.xlane.xlu0 %150
    %152 = vadd.xlane.f32.xlu0 %v147
    %v153 = vpop.xlane.xlu0 %152
    %154 = vadd.xlane.f32.xlu0 %v148
    %v155 = vpop.xlane.xlu0 %154
    %156 = vadd.xlane.f32.xlu0 %v149
    %v157 = vpop.xlane.xlu0 %156
    %v158 = vadd.f32 %v151, 0.0
    %v159 = vadd.f32 %v153, 0.0
    %v160 = vadd.f32 %v155, 0.0
    %v161 = vadd.f32 %v157, 0.0
    %162 = vadd.xlane.f32.xlu0 %v123
    %v163 = vpop.xlane.xlu0 %162
    %164 = vadd.xlane.f32.xlu0 %v126
    %v165 = vpop.xlane.xlu0 %164
    %166 = vadd.xlane.f32.xlu0 %v129
    %v167 = vpop.xlane.xlu0 %166
    %168 = vadd.xlane.f32.xlu0 %v132
    %v169 = vpop.xlane.xlu0 %168
    %v170 = vadd.f32 %v142, %v163
    %v171 = vadd.f32 %v143, %v165
    %v172 = vadd.f32 %v144, %v167
    %v173 = vadd.f32 %v145, %v169
    %v174 = vmul.f32 %v123, %v123
    %v175 = vmul.f32 %v126, %v126
    %v176 = vmul.f32 %v129, %v129
    %v177 = vmul.f32 %v132, %v132
    %178 = vadd.xlane.f32.xlu0 %v174
    %v179 = vpop.xlane.xlu0 %178
    %180 = vadd.xlane.f32.xlu0 %v175
    %v181 = vpop.xlane.xlu0 %180
    %182 = vadd.xlane.f32.xlu0 %v176
    %v183 = vpop.xlane.xlu0 %182
    %184 = vadd.xlane.f32.xlu0 %v177
    %v185 = vpop.xlane.xlu0 %184
    %v186 = vadd.f32 %v158, %v179
    %v187 = vadd.f32 %v159, %v181
    %v188 = vadd.f32 %v160, %v183
    %v189 = vadd.f32 %v161, %v185
    %v190 = vmul.f32 %v170, 0.00390625
    %v191 = vmul.f32 %v171, 0.00390625
    %v192 = vmul.f32 %v172, 0.00390625
    %v193 = vmul.f32 %v173, 0.00390625
    %v194 = vmul.f32 %v186, 0.00390625
    %v195 = vmul.f32 %v187, 0.00390625
    %v196 = vmul.f32 %v188, 0.00390625
    %v197 = vmul.f32 %v189, 0.00390625
    %v198 = vmul.f32 %v190, %v190
    %v199 = vmul.f32 %v191, %v191
    %v200 = vmul.f32 %v192, %v192
    %v201 = vmul.f32 %v193, %v193
    %v202 = vsub.f32 %v194, %v198
    %v203 = vsub.f32 %v195, %v199
    %v204 = vsub.f32 %v196, %v200
    %v205 = vsub.f32 %v197, %v201
    %v206 = vmax.f32 %v202, 0.0
    %v207 = vmax.f32 %v203, 0.0
    %v208 = vmax.f32 %v204, 0.0
    %v209 = vmax.f32 %v205, 0.0
    %v210 = vadd.f32 %v206, 1e-05
    %v211 = vadd.f32 %v207, 1e-05
    %v212 = vadd.f32 %v208, 1e-05
    %v213 = vadd.f32 %v209, 1e-05
    %v214 = vrsqrt.pop %v210
    %v215 = vmul.f32 %v214, %v210
    %v216 = vmul.f32 %v215, %v214
    %v217 = vmul.f32 0.5, %v216
    %v218 = vsub.f32 1.5, %v217
    %v219 = vmul.f32 %v214, %v218
    %vm220 = vweird.f32 %v210
    %vm221 = vweird.f32 %v214
    %vm222 = vmor %vm220, %vm221
    %v223 = vsel %vm222, %v214, %v219
    %v224 = vrsqrt.pop %v211
    %v225 = vmul.f32 %v224, %v211
    %v226 = vmul.f32 %v225, %v224
    %v227 = vmul.f32 0.5, %v226
    %v228 = vsub.f32 1.5, %v227
    %v229 = vmul.f32 %v224, %v228
    %vm230 = vweird.f32 %v211
    %vm231 = vweird.f32 %v224
    %vm232 = vmor %vm230, %vm231
    %v233 = vsel %vm232, %v224, %v229
    %v234 = vrsqrt.pop %v212
    %v235 = vmul.f32 %v234, %v212
    %v236 = vmul.f32 %v235, %v234
    %v237 = vmul.f32 0.5, %v236
    %v238 = vsub.f32 1.5, %v237
    %v239 = vmul.f32 %v234, %v238
    %vm240 = vweird.f32 %v212
    %vm241 = vweird.f32 %v234
    %vm242 = vmor %vm240, %vm241
    %v243 = vsel %vm242, %v234, %v239
    %v244 = vrsqrt.pop %v213
    %v245 = vmul.f32 %v244, %v213
    %v246 = vmul.f32 %v245, %v244
    %v247 = vmul.f32 0.5, %v246
    %v248 = vsub.f32 1.5, %v247
    %v249 = vmul.f32 %v244, %v248
    %vm250 = vweird.f32 %v213
    %vm251 = vweird.f32 %v244
    %vm252 = vmor %vm250, %vm251
    %v253 = vsel %vm252, %v244, %v249
    %v254 = vmul.f32 %v42, %v223
    %v255 = vmul.f32 %v43, %v233
    %v256 = vmul.f32 %v44, %v243
    %v257 = vmul.f32 %v45, %v253
    %v258 = vmul.f32 %v190, %v254
    %v259 = vmul.f32 %v191, %v255
    %v260 = vmul.f32 %v192, %v256
    %v261 = vmul.f32 %v193, %v257
    %v262 = vsub.f32 %v46, %v258
    %v263 = vsub.f32 %v47, %v259
    %v264 = vsub.f32 %v48, %v260
    %v265 = vsub.f32 %v49, %v261
    %267 = vset.pattern.permute.xlu0 0
    %268 = vperm.xlu0 %267, %v254
    %v269 = vpop.permute.xlu0 %268
    %272 = vset.pattern.permute.xlu0 0
    %273 = vperm.xlu0 %272, %v255
    %v274 = vpop.permute.xlu0 %273
    %277 = vset.pattern.permute.xlu0 0
    %278 = vperm.xlu0 %277, %v256
    %v279 = vpop.permute.xlu0 %278
    %282 = vset.pattern.permute.xlu0 0
    %283 = vperm.xlu0 %282, %v257
    %v284 = vpop.permute.xlu0 %283
    %v286 = vmul.f32 %v89, %v269
    %v287 = vmul.f32 %v92, %v274
    %v288 = vmul.f32 %v95, %v279
    %v289 = vmul.f32 %v98, %v284
    %291 = vset.pattern.permute.xlu0 0
    %292 = vperm.xlu0 %291, %v262
    %v293 = vpop.permute.xlu0 %292
    %296 = vset.pattern.permute.xlu0 0
    %297 = vperm.xlu0 %296, %v263
    %v298 = vpop.permute.xlu0 %297
    %301 = vset.pattern.permute.xlu0 0
    %302 = vperm.xlu0 %301, %v264
    %v303 = vpop.permute.xlu0 %302
    %306 = vset.pattern.permute.xlu0 0
    %307 = vperm.xlu0 %306, %v265
    %v308 = vpop.permute.xlu0 %307
    %v310 = vadd.f32 %v286, %v293
    %v311 = vadd.f32 %v287, %v298
    %v312 = vadd.f32 %v288, %v303
    %v313 = vadd.f32 %v289, %v308
    %v314 = vmul.f32 %v310, 0.5
    %v315 = vmul.f32 %v311, 0.5
    %v316 = vmul.f32 %v312, 0.5
    %v317 = vmul.f32 %v313, 0.5
    %v318 = vmul.f32 %v310, 0.70710677
    %v319 = vmul.f32 %v311, 0.70710677
    %v320 = vmul.f32 %v312, 0.70710677
    %v321 = vmul.f32 %v313, 0.70710677
    %v322 = vmul.f32 %v318, %v318
    %v323 = vmin.f32 16.0, %v322
    %v324 = vmul.f32 %v323, 2.1237322e-06
    %v325 = vadd.f32 %v324, 0.00028619796
    %v326 = vmul.f32 %v323, %v325
    %v327 = vadd.f32 %v326, 0.0036580483
    %v328 = vmul.f32 %v323, %v327
    %v329 = vadd.f32 %v328, 0.05243302
    %v330 = vmul.f32 %v323, %v329
    %v331 = vadd.f32 %v330, 0.18741608
    %v332 = vmul.f32 %v323, %v331
    %v333 = vadd.f32 %v332, 1.1283791
    %v334 = vmul.f32 %v318, %v333
    %v335 = vmul.f32 %v323, 3.8918573e-05
    %v336 = vadd.f32 %v335, 0.001143296
    %v337 = vmul.f32 %v323, %v336
    %v338 = vadd.f32 %v337, 0.014752088
    %v339 = vmul.f32 %v323, %v338
    %v340 = vadd.f32 %v339, 0.112945676
    %v341 = vmul.f32 %v323, %v340
    %v342 = vadd.f32 %v341, 0.4994258
    %v343 = vmul.f32 %v323, %v342
    %v344 = vadd.f32 %v343, 1.0
    %v345 = vrcp.pop %v344
    %v346 = vmul.f32 %v344, %v345
    %v347 = vsub.f32 1.0, %v346
    %v348 = vmul.f32 %v345, %v347
    %v349 = vadd.f32 %v345, %v348
    %vm350 = vweird.f32 %v344
    %vm351 = vweird.f32 %v345
    %vm352 = vmor %vm350, %vm351
    %v353 = vsel %vm352, %v345, %v349
    %v354 = vand.u32 2147483647, %v344
    %vm355 = vcmp.eq.f32.partialorder %v354, 8.507059e+37
    %v356 = vand.u32 %v344, 2147483648
    %v357 = vor.u32 1.1754944e-38, %v356
    %v358 = vsel %vm355, %v357, %v353
    %v359 = vmul.f32 %v334, %v358
    %v360 = vmin.f32 %v359, 1.0
    %v361 = vmax.f32 %v360, -1.0
    %v362 = vmul.f32 %v319, %v319
    %v363 = vmin.f32 16.0, %v362
    %v364 = vmul.f32 %v363, 2.1237322e-06
    %v365 = vadd.f32 %v364, 0.00028619796
    %v366 = vmul.f32 %v363, %v365
    %v367 = vadd.f32 %v366, 0.0036580483
    %v368 = vmul.f32 %v363, %v367
    %v369 = vadd.f32 %v368, 0.05243302
    %v370 = vmul.f32 %v363, %v369
    %v371 = vadd.f32 %v370, 0.18741608
    %v372 = vmul.f32 %v363, %v371
    %v373 = vadd.f32 %v372, 1.1283791
    %v374 = vmul.f32 %v319, %v373
    %v375 = vmul.f32 %v363, 3.8918573e-05
    %v376 = vadd.f32 %v375, 0.001143296
    %v377 = vmul.f32 %v363, %v376
    %v378 = vadd.f32 %v377, 0.014752088
    %v379 = vmul.f32 %v363, %v378
    %v380 = vadd.f32 %v379, 0.112945676
    %v381 = vmul.f32 %v363, %v380
    %v382 = vadd.f32 %v381, 0.4994258
    %v383 = vmul.f32 %v363, %v382
    %v384 = vadd.f32 %v383, 1.0
    %v385 = vrcp.pop %v384
    %v386 = vmul.f32 %v384, %v385
    %v387 = vsub.f32 1.0, %v386
    %v388 = vmul.f32 %v385, %v387
    %v389 = vadd.f32 %v385, %v388
    %vm390 = vweird.f32 %v384
    %vm391 = vweird.f32 %v385
    %vm392 = vmor %vm390, %vm391
    %v393 = vsel %vm392, %v385, %v389
    %v394 = vand.u32 2147483647, %v384
    %vm395 = vcmp.eq.f32.partialorder %v394, 8.507059e+37
    %v396 = vand.u32 %v384, 2147483648
    %v397 = vor.u32 1.1754944e-38, %v396
    %v398 = vsel %vm395, %v397, %v393
    %v399 = vmul.f32 %v374, %v398
    %v400 = vmin.f32 %v399, 1.0
    %v401 = vmax.f32 %v400, -1.0
    %v402 = vmul.f32 %v320, %v320
    %v403 = vmin.f32 16.0, %v402
    %v404 = vmul.f32 %v403, 2.1237322e-06
    %v405 = vadd.f32 %v404, 0.00028619796
    %v406 = vmul.f32 %v403, %v405
    %v407 = vadd.f32 %v406, 0.0036580483
    %v408 = vmul.f32 %v403, %v407
    %v409 = vadd.f32 %v408, 0.05243302
    %v410 = vmul.f32 %v403, %v409
    %v411 = vadd.f32 %v410, 0.18741608
    %v412 = vmul.f32 %v403, %v411
    %v413 = vadd.f32 %v412, 1.1283791
    %v414 = vmul.f32 %v320, %v413
    %v415 = vmul.f32 %v403, 3.8918573e-05
    %v416 = vadd.f32 %v415, 0.001143296
    %v417 = vmul.f32 %v403, %v416
    %v418 = vadd.f32 %v417, 0.014752088
    %v419 = vmul.f32 %v403, %v418
    %v420 = vadd.f32 %v419, 0.112945676
    %v421 = vmul.f32 %v403, %v420
    %v422 = vadd.f32 %v421, 0.4994258
    %v423 = vmul.f32 %v403, %v422
    %v424 = vadd.f32 %v423, 1.0
    %v425 = vrcp.pop %v424
    %v426 = vmul.f32 %v424, %v425
    %v427 = vsub.f32 1.0, %v426
    %v428 = vmul.f32 %v425, %v427
    %v429 = vadd.f32 %v425, %v428
    %vm430 = vweird.f32 %v424
    %vm431 = vweird.f32 %v425
    %vm432 = vmor %vm430, %vm431
    %v433 = vsel %vm432, %v425, %v429
    %v434 = vand.u32 2147483647, %v424
    %vm435 = vcmp.eq.f32.partialorder %v434, 8.507059e+37
    %v436 = vand.u32 %v424, 2147483648
    %v437 = vor.u32 1.1754944e-38, %v436
    %v438 = vsel %vm435, %v437, %v433
    %v439 = vmul.f32 %v414, %v438
    %v440 = vmin.f32 %v439, 1.0
    %v441 = vmax.f32 %v440, -1.0
    %v442 = vmul.f32 %v321, %v321
    %v443 = vmin.f32 16.0, %v442
    %v444 = vmul.f32 %v443, 2.1237322e-06
    %v445 = vadd.f32 %v444, 0.00028619796
    %v446 = vmul.f32 %v443, %v445
    %v447 = vadd.f32 %v446, 0.0036580483
    %v448 = vmul.f32 %v443, %v447
    %v449 = vadd.f32 %v448, 0.05243302
    %v450 = vmul.f32 %v443, %v449
    %v451 = vadd.f32 %v450, 0.18741608
    %v452 = vmul.f32 %v443, %v451
    %v453 = vadd.f32 %v452, 1.1283791
    %v454 = vmul.f32 %v321, %v453
    %v455 = vmul.f32 %v443, 3.8918573e-05
    %v456 = vadd.f32 %v455, 0.001143296
    %v457 = vmul.f32 %v443, %v456
    %v458 = vadd.f32 %v457, 0.014752088
    %v459 = vmul.f32 %v443, %v458
    %v460 = vadd.f32 %v459, 0.112945676
    %v461 = vmul.f32 %v443, %v460
    %v462 = vadd.f32 %v461, 0.4994258
    %v463 = vmul.f32 %v443, %v462
    %v464 = vadd.f32 %v463, 1.0
    %v465 = vrcp.pop %v464
    %v466 = vmul.f32 %v464, %v465
    %v467 = vsub.f32 1.0, %v466
    %v468 = vmul.f32 %v465, %v467
    %v469 = vadd.f32 %v465, %v468
    %vm470 = vweird.f32 %v464
    %vm471 = vweird.f32 %v465
    %vm472 = vmor %vm470, %vm471
    %v473 = vsel %vm472, %v465, %v469
    %v474 = vand.u32 2147483647, %v464
    %vm475 = vcmp.eq.f32.partialorder %v474, 8.507059e+37
    %v476 = vand.u32 %v464, 2147483648
    %v477 = vor.u32 1.1754944e-38, %v476
    %v478 = vsel %vm475, %v477, %v473
    %v479 = vmul.f32 %v454, %v478
    %v480 = vmin.f32 %v479, 1.0
    %v481 = vmax.f32 %v480, -1.0
    %v482 = vadd.f32 %v361, 1.0
    %v483 = vadd.f32 %v401, 1.0
    %v484 = vadd.f32 %v441, 1.0
    %v485 = vadd.f32 %v481, 1.0
    %v486 = vmul.f32 %v314, %v482
    %v487 = vmul.f32 %v315, %v483
    %v488 = vmul.f32 %v316, %v484
    %v489 = vmul.f32 %v317, %v485
    %491 = vset.pattern.permute.xlu0 0
    %492 = vperm.xlu0 %491, %v50
    %v493 = vpop.permute.xlu0 %492
    %496 = vset.pattern.permute.xlu0 0
    %497 = vperm.xlu0 %496, %v51
    %v498 = vpop.permute.xlu0 %497
    %501 = vset.pattern.permute.xlu0 0
    %502 = vperm.xlu0 %501, %v52
    %v503 = vpop.permute.xlu0 %502
    %506 = vset.pattern.permute.xlu0 0
    %507 = vperm.xlu0 %506, %v53
    %v508 = vpop.permute.xlu0 %507
    %v511 = vsel %vm58, %v38, 0
    %v514 = vsel %vm58, %v39, 0
    %v517 = vsel %vm58, %v40, 0
    %v520 = vsel %vm58, %v41, 0
    %522 = vmatpush.msra.mxu0 0.0
    %523 = vmatpush.msra.mxu0 0.0
    %524 = vmatpush.msra.mxu0 0.0
    %525 = vmatpush.msra.mxu0 0.0
    %526 = vmatpush.msra.mxu0 0.0
    %527 = vmatpush.msra.mxu0 0.0
    %528 = vmatpush.msra.mxu0 0.0
    %529 = vmatpush.msra.mxu0 0.0
    %530 = vmatpush.msra.mxu0 0.0
    %531 = vmatpush.msra.mxu0 0.0
    %532 = vmatpush.msra.mxu0 0.0
    %533 = vmatpush.msra.mxu0 0.0
    %534 = vmatpush.msra.mxu0 %v489
    %535 = vmatpush.msra.mxu0 %v488
    %536 = vmatpush.msra.mxu0 %v487
    %537 = vmatpush.msra.mxu0 %v486
    %538 = vmatmul.f32.gmra.mxu0 %v511
    %v539 = vpop.f32.mrf.mxu0
    %v540 = vadd.f32 %v493, %v539
    %541 = vmatmul.f32.gmra.mxu0 %v514
    %v542 = vpop.f32.mrf.mxu0
    %v543 = vadd.f32 %v498, %v542
    %544 = vmatmul.f32.gmra.mxu0 %v517
    %v545 = vpop.f32.mrf.mxu0
    %v546 = vadd.f32 %v503, %v545
    %547 = vmatmul.f32.gmra.mxu0 %v520
    %v548 = vpop.f32.mrf.mxu0
    %v549 = vadd.f32 %v508, %v548
    %550 = vdwg.mxu0
    %551 = vst [vmem:[#allocation5] sm:$0xff] %v540
    %552 = vst [vmem:[#allocation5 + $0x8] sm:$0xff] %v543
    %553 = vst [vmem:[#allocation5 + $0x10] sm:$0xff] %v546
    %554 = vst [vmem:[#allocation5 + $0x18] sm:$0xff] %v549
    %v555 = vmul.f32 %v123, %v269
    %v556 = vmul.f32 %v126, %v274
    %v557 = vmul.f32 %v129, %v279
    %v558 = vmul.f32 %v132, %v284
    %v559 = vadd.f32 %v555, %v293
    %v560 = vadd.f32 %v556, %v298
    %v561 = vadd.f32 %v557, %v303
    %v562 = vadd.f32 %v558, %v308
    %v563 = vmul.f32 %v559, 0.5
    %v564 = vmul.f32 %v560, 0.5
    %v565 = vmul.f32 %v561, 0.5
    %v566 = vmul.f32 %v562, 0.5
    %v567 = vmul.f32 %v559, 0.70710677
    %v568 = vmul.f32 %v560, 0.70710677
    %v569 = vmul.f32 %v561, 0.70710677
    %v570 = vmul.f32 %v562, 0.70710677
    %v571 = vmul.f32 %v567, %v567
    %v572 = vmin.f32 16.0, %v571
    %v573 = vmul.f32 %v572, 2.1237322e-06
    %v574 = vadd.f32 %v573, 0.00028619796
    %v575 = vmul.f32 %v572, %v574
    %v576 = vadd.f32 %v575, 0.0036580483
    %v577 = vmul.f32 %v572, %v576
    %v578 = vadd.f32 %v577, 0.05243302
    %v579 = vmul.f32 %v572, %v578
    %v580 = vadd.f32 %v579, 0.18741608
    %v581 = vmul.f32 %v572, %v580
    %v582 = vadd.f32 %v581, 1.1283791
    %v583 = vmul.f32 %v567, %v582
    %v584 = vmul.f32 %v572, 3.8918573e-05
    %v585 = vadd.f32 %v584, 0.001143296
    %v586 = vmul.f32 %v572, %v585
    %v587 = vadd.f32 %v586, 0.014752088
    %v588 = vmul.f32 %v572, %v587
    %v589 = vadd.f32 %v588, 0.112945676
    %v590 = vmul.f32 %v572, %v589
    %v591 = vadd.f32 %v590, 0.4994258
    %v592 = vmul.f32 %v572, %v591
    %v593 = vadd.f32 %v592, 1.0
    %v594 = vrcp.pop %v593
    %v595 = vmul.f32 %v593, %v594
    %v596 = vsub.f32 1.0, %v595
    %v597 = vmul.f32 %v594, %v596
    %v598 = vadd.f32 %v594, %v597
    %vm599 = vweird.f32 %v593
    %vm600 = vweird.f32 %v594
    %vm601 = vmor %vm599, %vm600
    %v602 = vsel %vm601, %v594, %v598
    %v603 = vand.u32 2147483647, %v593
    %vm604 = vcmp.eq.f32.partialorder %v603, 8.507059e+37
    %v605 = vand.u32 %v593, 2147483648
    %v606 = vor.u32 1.1754944e-38, %v605
    %v607 = vsel %vm604, %v606, %v602
    %v608 = vmul.f32 %v583, %v607
    %v609 = vmin.f32 %v608, 1.0
    %v610 = vmax.f32 %v609, -1.0
    %v611 = vmul.f32 %v568, %v568
    %v612 = vmin.f32 16.0, %v611
    %v613 = vmul.f32 %v612, 2.1237322e-06
    %v614 = vadd.f32 %v613, 0.00028619796
    %v615 = vmul.f32 %v612, %v614
    %v616 = vadd.f32 %v615, 0.0036580483
    %v617 = vmul.f32 %v612, %v616
    %v618 = vadd.f32 %v617, 0.05243302
    %v619 = vmul.f32 %v612, %v618
    %v620 = vadd.f32 %v619, 0.18741608
    %v621 = vmul.f32 %v612, %v620
    %v622 = vadd.f32 %v621, 1.1283791
    %v623 = vmul.f32 %v568, %v622
    %v624 = vmul.f32 %v612, 3.8918573e-05
    %v625 = vadd.f32 %v624, 0.001143296
    %v626 = vmul.f32 %v612, %v625
    %v627 = vadd.f32 %v626, 0.014752088
    %v628 = vmul.f32 %v612, %v627
    %v629 = vadd.f32 %v628, 0.112945676
    %v630 = vmul.f32 %v612, %v629
    %v631 = vadd.f32 %v630, 0.4994258
    %v632 = vmul.f32 %v612, %v631
    %v633 = vadd.f32 %v632, 1.0
    %v634 = vrcp.pop %v633
    %v635 = vmul.f32 %v633, %v634
    %v636 = vsub.f32 1.0, %v635
    %v637 = vmul.f32 %v634, %v636
    %v638 = vadd.f32 %v634, %v637
    %vm639 = vweird.f32 %v633
    %vm640 = vweird.f32 %v634
    %vm641 = vmor %vm639, %vm640
    %v642 = vsel %vm641, %v634, %v638
    %v643 = vand.u32 2147483647, %v633
    %vm644 = vcmp.eq.f32.partialorder %v643, 8.507059e+37
    %v645 = vand.u32 %v633, 2147483648
    %v646 = vor.u32 1.1754944e-38, %v645
    %v647 = vsel %vm644, %v646, %v642
    %v648 = vmul.f32 %v623, %v647
    %v649 = vmin.f32 %v648, 1.0
    %v650 = vmax.f32 %v649, -1.0
    %v651 = vmul.f32 %v569, %v569
    %v652 = vmin.f32 16.0, %v651
    %v653 = vmul.f32 %v652, 2.1237322e-06
    %v654 = vadd.f32 %v653, 0.00028619796
    %v655 = vmul.f32 %v652, %v654
    %v656 = vadd.f32 %v655, 0.0036580483
    %v657 = vmul.f32 %v652, %v656
    %v658 = vadd.f32 %v657, 0.05243302
    %v659 = vmul.f32 %v652, %v658
    %v660 = vadd.f32 %v659, 0.18741608
    %v661 = vmul.f32 %v652, %v660
    %v662 = vadd.f32 %v661, 1.1283791
    %v663 = vmul.f32 %v569, %v662
    %v664 = vmul.f32 %v652, 3.8918573e-05
    %v665 = vadd.f32 %v664, 0.001143296
    %v666 = vmul.f32 %v652, %v665
    %v667 = vadd.f32 %v666, 0.014752088
    %v668 = vmul.f32 %v652, %v667
    %v669 = vadd.f32 %v668, 0.112945676
    %v670 = vmul.f32 %v652, %v669
    %v671 = vadd.f32 %v670, 0.4994258
    %v672 = vmul.f32 %v652, %v671
    %v673 = vadd.f32 %v672, 1.0
    %v674 = vrcp.pop %v673
    %v675 = vmul.f32 %v673, %v674
    %v676 = vsub.f32 1.0, %v675
    %v677 = vmul.f32 %v674, %v676
    %v678 = vadd.f32 %v674, %v677
    %vm679 = vweird.f32 %v673
    %vm680 = vweird.f32 %v674
    %vm681 = vmor %vm679, %vm680
    %v682 = vsel %vm681, %v674, %v678
    %v683 = vand.u32 2147483647, %v673
    %vm684 = vcmp.eq.f32.partialorder %v683, 8.507059e+37
    %v685 = vand.u32 %v673, 2147483648
    %v686 = vor.u32 1.1754944e-38, %v685
    %v687 = vsel %vm684, %v686, %v682
    %v688 = vmul.f32 %v663, %v687
    %v689 = vmin.f32 %v688, 1.0
    %v690 = vmax.f32 %v689, -1.0
    %v691 = vmul.f32 %v570, %v570
    %v692 = vmin.f32 16.0, %v691
    %v693 = vmul.f32 %v692, 2.1237322e-06
    %v694 = vadd.f32 %v693, 0.00028619796
    %v695 = vmul.f32 %v692, %v694
    %v696 = vadd.f32 %v695, 0.0036580483
    %v697 = vmul.f32 %v692, %v696
    %v698 = vadd.f32 %v697, 0.05243302
    %v699 = vmul.f32 %v692, %v698
    %v700 = vadd.f32 %v699, 0.18741608
    %v701 = vmul.f32 %v692, %v700
    %v702 = vadd.f32 %v701, 1.1283791
    %v703 = vmul.f32 %v570, %v702
    %v704 = vmul.f32 %v692, 3.8918573e-05
    %v705 = vadd.f32 %v704, 0.001143296
    %v706 = vmul.f32 %v692, %v705
    %v707 = vadd.f32 %v706, 0.014752088
    %v708 = vmul.f32 %v692, %v707
    %v709 = vadd.f32 %v708, 0.112945676
    %v710 = vmul.f32 %v692, %v709
    %v711 = vadd.f32 %v710, 0.4994258
    %v712 = vmul.f32 %v692, %v711
    %v713 = vadd.f32 %v712, 1.0
    %v714 = vrcp.pop %v713
    %v715 = vmul.f32 %v713, %v714
    %v716 = vsub.f32 1.0, %v715
    %v717 = vmul.f32 %v714, %v716
    %v718 = vadd.f32 %v714, %v717
    %vm719 = vweird.f32 %v713
    %vm720 = vweird.f32 %v714
    %vm721 = vmor %vm719, %vm720
    %v722 = vsel %vm721, %v714, %v718
    %v723 = vand.u32 2147483647, %v713
    %vm724 = vcmp.eq.f32.partialorder %v723, 8.507059e+37
    %v725 = vand.u32 %v713, 2147483648
    %v726 = vor.u32 1.1754944e-38, %v725
    %v727 = vsel %vm724, %v726, %v722
    %v728 = vmul.f32 %v703, %v727
    %v729 = vmin.f32 %v728, 1.0
    %v730 = vmax.f32 %v729, -1.0
    %v731 = vadd.f32 %v610, 1.0
    %v732 = vadd.f32 %v650, 1.0
    %v733 = vadd.f32 %v690, 1.0
    %v734 = vadd.f32 %v730, 1.0
    %v735 = vmul.f32 %v563, %v731
    %v736 = vmul.f32 %v564, %v732
    %v737 = vmul.f32 %v565, %v733
    %v738 = vmul.f32 %v566, %v734
    %739 = vmatpush.msra.mxu0 0.0
    %740 = vmatpush.msra.mxu0 0.0
    %741 = vmatpush.msra.mxu0 0.0
    %742 = vmatpush.msra.mxu0 0.0
    %743 = vmatpush.msra.mxu0 0.0
    %744 = vmatpush.msra.mxu0 0.0
    %745 = vmatpush.msra.mxu0 0.0
    %746 = vmatpush.msra.mxu0 0.0
    %747 = vmatpush.msra.mxu0 0.0
    %748 = vmatpush.msra.mxu0 0.0
    %749 = vmatpush.msra.mxu0 0.0
    %750 = vmatpush.msra.mxu0 0.0
    %751 = vmatpush.msra.mxu0 %v738
    %752 = vmatpush.msra.mxu0 %v737
    %753 = vmatpush.msra.mxu0 %v736
    %754 = vmatpush.msra.mxu0 %v735
    %755 = vmatmul.f32.gmra.mxu0 %v511
    %v756 = vpop.f32.mrf.mxu0
    %v757 = vadd.f32 %v493, %v756
    %758 = vmatmul.f32.gmra.mxu0 %v514
    %v759 = vpop.f32.mrf.mxu0
    %v760 = vadd.f32 %v498, %v759
    %761 = vmatmul.f32.gmra.mxu0 %v517
    %v762 = vpop.f32.mrf.mxu0
    %v763 = vadd.f32 %v503, %v762
    %764 = vmatmul.f32.gmra.mxu0 %v520
    %v765 = vpop.f32.mrf.mxu0
    %v766 = vadd.f32 %v508, %v765
    %767 = vdwg.mxu0
    %s768 = scalar_lea.vmem [#allocation5], 32
    %769 = vst [vmem:[%s768] sm:$0xff] %v757
    %770 = vst [vmem:[%s768 + $0x8] sm:$0xff] %v760
    %771 = vst [vmem:[%s768 + $0x10] sm:$0xff] %v763
    %772 = vst [vmem:[%s768 + $0x18] sm:$0xff] %v766
    // Predicated region
    $region22: #{tpu_custom_call.1} parent=1 // pred_check
      _
    $region23: #{tpu_custom_call.1} parent=1 // pred_check_branch
      %774 = sbr.rel (0) target = $region25
    $region24: #{tpu_custom_call.1} parent=1 // pred_region
      %776 = vsyncadd [#allocation4], 0
      %s777 = sshll.u32 [#allocation5], 4
      %s778 = int_to_ptr.vmem [resolvable:$true] %s777
      %s779 = sshll.u32 %s4, 4
      %s780 = int_to_ptr.hbm [resolvable:$true] %s779
      %785 = dma.vmem_to_hbm [thread:$0]  %s778, 1024, %s780, [#allocation4], 128, 128, 8
    $region25: #{tpu_custom_call.1} parent=1 // pred_fallthru
      _
    // Predicated region
    $region26: #{tpu_custom_call.1} parent=1 // pred_check
      _
    $region27: #{tpu_custom_call.1} parent=1 // pred_check_branch
      %787 = sbr.rel (0) target = $region29
    $region28: #{tpu_custom_call.1} parent=1 // pred_region
      %789 = dma.done [#allocation4], 1024
    $region29: #{tpu_custom_call.1} parent=1 // pred_fallthru
      _
    %790 = vsyncpa [#allocation3], 1
    %791 = vsyncpa [#allocation4], 1

</llo_original>
